<compile_context>
chip_gen: v6e
topology: v6e:2x2x1
jax: 0.10.0
libtpu: 0.0.40
codegen_flags: <defaults>
</compile_context>

<pallas_src>
import functools

import jax
import jax.numpy as jnp
from jax.experimental import pallas as pl
from jax.experimental.pallas import tpu as pltpu

BN_EPS = 1e-5
MAX_TM = 32768                       # lane-axis tile size upper bound
NUM_CORE_SPLITS = 2                  # shard pass-1 tiles across v7x's two TCs
VMEM_LIMIT_BYTES = 48 * 1024 * 1024  # > default scoped limit, < v7x physical


def _cdiv(a, b):
    return -(-a // b)


def _round_up(x, m):
    return _cdiv(x, m) * m


def _initial_block_kernel(p_ref, w_ref, pre_ref, sum_ref, ssq_ref, *,
                          cin, m_total, tm, tiles_per_core):
    """Conv-as-matmul + 3x3/s2 max-pool + per-channel sum/sumsq for one M tile."""
    c = pl.program_id(0)          # core-split index (v7x megacore sharding)
    i = pl.program_id(1)          # M-tile index within this core's range

    @pl.when(i == 0)
    def _init():
        sum_ref[...] = jnp.zeros_like(sum_ref)
        ssq_ref[...] = jnp.zeros_like(ssq_ref)

    p = p_ref[...]                                   # [9*cin, TM], -inf where padded
    pz = jnp.where(p == -jnp.inf, 0.0, p)            # conv branch uses zero padding

    # Main branch: 3x3/s2 conv == one [Cmain, K] @ [K, TM] matmul on the MXU.
    main = jnp.dot(w_ref[...], pz, preferred_element_type=jnp.float32)  # [Cmain, TM]

    # Extension branch: 3x3/s2 max pool == balanced-tree max over the 9 taps
    # (-inf pads drop out, matching PyTorch MaxPool2d padding semantics).
    taps = [p[t * cin:(t + 1) * cin, :] for t in range(9)]
    while len(taps) > 1:
        nxt = [jnp.maximum(taps[j], taps[j + 1]) for j in range(0, len(taps) - 1, 2)]
        if len(taps) % 2:
            nxt.append(taps[-1])
        taps = nxt
    ext = taps[0]                                    # [cin, TM]

    out = jnp.concatenate([main, ext], axis=0)       # [Cout, TM] (sublane concat)

    def _store_and_accumulate(vals):
        pre_ref[...] = vals
        # TODO(synk): on v7x a lane-partial [Cout, 128] accumulator with a single
        # final cross-lane reduce would trim per-step XLU work further.
        sum_ref[...] += jnp.sum(vals, axis=-1, keepdims=True)           # [Cout, 1]
        ssq_ref[...] += jnp.sum(vals * vals, axis=-1, keepdims=True)    # [Cout, 1]

    tile_start = (c * tiles_per_core + i) * tm
    tile_end = tile_start + tm

    # Padding-free tiles (the common case) skip the mask entirely.
    @pl.when(tile_end <= m_total)
    def _full_tile():
        _store_and_accumulate(out)

    # Tiles overlapping the M padding zero the padded columns so BN statistics
    # stay exact and no -inf reaches the pre-BN buffer.
    @pl.when(tile_end > m_total)
    def _tail_tile():
        col = tile_start + jax.lax.broadcasted_iota(jnp.int32, out.shape, 1)
        _store_and_accumulate(jnp.where(col < m_total, out, 0.0))


@jax.jit
def initial_block_forward(x_nchw, conv_w, gamma, beta):
    """Pallas implementation of ENet InitialBlock.forward.

    x_nchw : [N, Cin, H, W]      (PyTorch NCHW)
    conv_w : [Cout-3, Cin, 3, 3] (PyTorch OIHW, bias=False)
    gamma, beta : [Cout]         BatchNorm2d affine parameters
    returns: [N, Cout, H//2, W//2]
    """
    N, Cin, H, W = x_nchw.shape
    Cout = gamma.shape[0]
    Cmain = Cout - 3
    Ho = (H - 1) // 2 + 1
    Wo = (W - 1) // 2 + 1
    M = N * Ho * Wo
    K = 9 * Cin

    # ---- im2col in NCHW order: W (lane-dense) stays the minor axis in every
    # intermediate, and the final reshape to [K, M] is free after the transpose.
    x = x_nchw.astype(jnp.float32)
    x_pad = jnp.pad(x, ((0, 0), (0, 0), (1, 1), (1, 1)),
                    constant_values=-jnp.inf)                  # -inf pool sentinel
    taps = [x_pad[:, :, dh:dh + 2 * Ho - 1:2, dw:dw + 2 * Wo - 1:2]
            for dh in range(3) for dw in range(3)]             # 9 x [N, Cin, Ho, Wo]
    patches = jnp.stack(taps, axis=0)                          # [9, N, Cin, Ho, Wo]
    patches = jnp.transpose(patches, (0, 2, 1, 3, 4)).reshape(K, M)  # rows=(kh,kw,ci)

    # ---- tiling over M (the lane axis).  Tile count rounded to a multiple of
    # NUM_CORE_SPLITS so v7x's two TensorCores get equal halves.
    n_tiles = max(_cdiv(M, MAX_TM), 1)
    n_tiles = _round_up(n_tiles, NUM_CORE_SPLITS)
    TM = _round_up(_cdiv(M, n_tiles), 128)
    n_tiles = _round_up(_cdiv(M, TM), NUM_CORE_SPLITS)
    tiles_per_core = n_tiles // NUM_CORE_SPLITS
    M_pad = n_tiles * TM
    if M_pad != M:
        patches = jnp.pad(patches, ((0, 0), (0, M_pad - M)),
                          constant_values=-jnp.inf)

    # PyTorch OIHW weights -> [Cmain, (kh, kw, ci)], matching the patch row order.
    w_mat = jnp.transpose(conv_w, (0, 2, 3, 1)).reshape(Cmain, K).astype(jnp.float32)

    kernel = functools.partial(_initial_block_kernel, cin=Cin, m_total=M,
                               tm=TM, tiles_per_core=tiles_per_core)

    pre, ch_sum, ch_ssq = pl.pallas_call(
        kernel,
        grid=(NUM_CORE_SPLITS, tiles_per_core),
        in_specs=[
            pl.BlockSpec((K, TM), lambda c, i: (0, c * tiles_per_core + i)),
            pl.BlockSpec((Cmain, K), lambda c, i: (0, 0)),          # weights resident
        ],
        out_specs=[
            pl.BlockSpec((Cout, TM), lambda c, i: (0, c * tiles_per_core + i)),
            pl.BlockSpec((None, Cout, 1), lambda c, i: (c, 0, 0)),  # per-core sum
            pl.BlockSpec((None, Cout, 1), lambda c, i: (c, 0, 0)),  # per-core sumsq
        ],
        out_shape=[
            jax.ShapeDtypeStruct((Cout, M_pad), jnp.float32),
            jax.ShapeDtypeStruct((NUM_CORE_SPLITS, Cout, 1), jnp.float32),
            jax.ShapeDtypeStruct((NUM_CORE_SPLITS, Cout, 1), jnp.float32),
        ],
        compiler_params=pltpu.CompilerParams(
            dimension_semantics=("parallel", "arbitrary"),
            vmem_limit_bytes=VMEM_LIMIT_BYTES),
    )(patches, w_mat)

    # ---- training-mode BatchNorm folded into one per-channel FMA.  The FMA +
    # ReLU + NCHW transpose fuse into a single XLA pass over the tensor (the old
    # Pallas "pass 2" HBM round trip is gone).
    ch_sum = jnp.sum(ch_sum, axis=0)                            # [Cout, 1]
    ch_ssq = jnp.sum(ch_ssq, axis=0)                            # [Cout, 1]
    inv_m = 1.0 / M
    mean = ch_sum * inv_m
    var = jnp.maximum(ch_ssq * inv_m - mean * mean, 0.0)        # biased (PyTorch fwd)
    scale = gamma.astype(jnp.float32).reshape(Cout, 1) * jax.lax.rsqrt(var + BN_EPS)
    shift = beta.astype(jnp.float32).reshape(Cout, 1) - mean * scale

    y = jnp.maximum(pre[:, :M] * scale + shift, 0.0)            # [Cout, M]
    return jnp.transpose(y.reshape(Cout, N, Ho, Wo), (1, 0, 2, 3))


def reference_forward(x_nchw, conv_w, gamma, beta):
    """Pure-JAX reference mirroring the PyTorch module (training-mode BN)."""
    main = jax.lax.conv_general_dilated(
        x_nchw, conv_w, window_strides=(2, 2), padding=((1, 1), (1, 1)),
        dimension_numbers=("NCHW", "OIHW", "NCHW"))
    ext = jax.lax.reduce_window(
        x_nchw, -jnp.inf, jax.lax.max,
        window_dimensions=(1, 1, 3, 3), window_strides=(1, 1, 2, 2),
        padding=((0, 0), (0, 0), (1, 1), (1, 1)))
    cat = jnp.concatenate([main, ext], axis=1)
    mean = cat.mean(axis=(0, 2, 3), keepdims=True)
    var = ((cat - mean) ** 2).mean(axis=(0, 2, 3), keepdims=True)
    norm = (cat - mean) * jax.lax.rsqrt(var + BN_EPS)
    y = norm * gamma.reshape(1, -1, 1, 1) + beta.reshape(1, -1, 1, 1)
    return jnp.maximum(y, 0.0)


if __name__ == "__main__":
    key = jax.random.PRNGKey(0)
    k_x, k_w = jax.random.split(key)

    N, Cin, H, W = 2, 3, 16, 16
    Cout = 16  # ENet initial block: 13 conv maps + 3 pooled maps

    x = jax.random.normal(k_x, (N, Cin, H, W), dtype=jnp.float32)
    conv_w = 0.1 * jax.random.normal(k_w, (Cout - 3, Cin, 3, 3), dtype=jnp.float32)
    gamma = jnp.ones((Cout,), dtype=jnp.float32)   # BatchNorm2d default init
    beta = jnp.zeros((Cout,), dtype=jnp.float32)

    out = jax.block_until_ready(initial_block_forward(x, conv_w, gamma, beta))
    ref = reference_forward(x, conv_w, gamma, beta)

    assert out.shape == (N, Cout, H // 2, W // 2), out.shape
    max_err = float(jnp.max(jnp.abs(out - ref)))
    assert max_err < 2e-4, f"mismatch vs reference: {max_err}"

    print("KERNEL_OK")
</pallas_src>

<mosaic_0001>
module attributes {stable_mosaic.version = 11 : i64} {
  func.func @_initial_block_kernel(%arg0: i32, %arg1: i32, %arg2: memref<27x128xf32, #tpu.memory_space<vmem>>, %arg3: memref<13x27xf32, #tpu.memory_space<vmem>>, %arg4: memref<16x128xf32, #tpu.memory_space<vmem>>, %arg5: memref<1x16x1xf32, #tpu.memory_space<vmem>>, %arg6: memref<1x16x1xf32, #tpu.memory_space<vmem>>) attributes {dimension_semantics = [#tpu.dimension_semantics<parallel>, #tpu.dimension_semantics<arbitrary>], iteration_bounds = array<i64: 2, 1>, scalar_prefetch = 0 : i64, scratch_operands = 0 : i64, tpu.core_type = #tpu.core_type<tc>, window_params = [{transform_indices = @transform_0, window_bounds = array<i64: 27, 128>}, {pipeline_mode = #tpu.pipeline_mode<synchronous>, transform_indices = @transform_1, window_bounds = array<i64: 13, 27>}, {transform_indices = @transform_2, window_bounds = array<i64: 16, 128>}, {transform_indices = @transform_3, window_bounds = array<i64: 1, 16, 1>}, {transform_indices = @transform_4, window_bounds = array<i64: 1, 16, 1>}]} {
    %c0_i32 = arith.constant 0 : i32
    %0 = arith.cmpi eq, %arg1, %c0_i32 : i32
    %1 = arith.extui %0 : i1 to i32
    %c0_i32_0 = arith.constant 0 : i32
    %2 = arith.cmpi ne, %1, %c0_i32_0 : i32
    scf.if %2 {
      %cst_11 = arith.constant 0.000000e+00 : f32
      %38 = vector.broadcast %cst_11 : f32 to vector<16x1xf32>
      %c0_12 = arith.constant 0 : index
      %c0_13 = arith.constant 0 : index
      %c0_14 = arith.constant 0 : index
      %39 = vector.load %arg5[%c0_12, %c0_13, %c0_14] : memref<1x16x1xf32, #tpu.memory_space<vmem>>, vector<1x16x1xf32>
      %40 = vector.shape_cast %39 : vector<1x16x1xf32> to vector<16x1xf32>
      %41 = vector.shape_cast %38 : vector<16x1xf32> to vector<1x16x1xf32>
      tpu.vector_store %arg5[%c0_12, %c0_13, %c0_14], %41 {strides = array<i32>} : memref<1x16x1xf32, #tpu.memory_space<vmem>>, vector<1x16x1xf32>,
      %cst_15 = arith.constant 0.000000e+00 : f32
      %42 = vector.broadcast %cst_15 : f32 to vector<16x1xf32>
      %c0_16 = arith.constant 0 : index
      %c0_17 = arith.constant 0 : index
      %c0_18 = arith.constant 0 : index
      %43 = vector.load %arg6[%c0_16, %c0_17, %c0_18] : memref<1x16x1xf32, #tpu.memory_space<vmem>>, vector<1x16x1xf32>
      %44 = vector.shape_cast %43 : vector<1x16x1xf32> to vector<16x1xf32>
      %45 = vector.shape_cast %42 : vector<16x1xf32> to vector<1x16x1xf32>
      tpu.vector_store %arg6[%c0_16, %c0_17, %c0_18], %45 {strides = array<i32>} : memref<1x16x1xf32, #tpu.memory_space<vmem>>, vector<1x16x1xf32>,
    } else {
    }
    %c0 = arith.constant 0 : index
    %c0_1 = arith.constant 0 : index
    %3 = vector.load %arg2[%c0, %c0_1] : memref<27x128xf32, #tpu.memory_space<vmem>>, vector<27x128xf32>
    %cst = arith.constant 0xFF800000 : f32
    %4 = vector.broadcast %cst : f32 to vector<27x128xf32>
    %5 = arith.cmpf oeq, %3, %4 : vector<27x128xf32>
    %cst_2 = arith.constant 0.000000e+00 : f32
    %6 = vector.broadcast %cst_2 : f32 to vector<27x128xf32>
    %7 = arith.select %5, %6, %3 : vector<27x128xi1>, vector<27x128xf32>
    %c0_3 = arith.constant 0 : index
    %c0_4 = arith.constant 0 : index
    %8 = vector.load %arg3[%c0_3, %c0_4] : memref<13x27xf32, #tpu.memory_space<vmem>>, vector<13x27xf32>
    %cst_5 = arith.constant dense<0.000000e+00> : vector<13x128xf32>
    %9 = tpu.matmul %8, %7, %cst_5 {dimension_numbers = #tpu.dot_dimension_numbers<[1], [0], [0], [1], [0, 0, 1, 1], [], []>} : vector<13x27xf32>, vector<27x128xf32>, vector<13x128xf32> -> vector<13x128xf32>
    %10 = vector.extract_strided_slice %3 {offsets = [0, 0], sizes = [3, 128], strides = [1, 1]} : vector<27x128xf32> to vector<3x128xf32>
    %11 = vector.extract_strided_slice %3 {offsets = [3, 0], sizes = [3, 128], strides = [1, 1]} : vector<27x128xf32> to vector<3x128xf32>
    %12 = vector.extract_strided_slice %3 {offsets = [6, 0], sizes = [3, 128], strides = [1, 1]} : vector<27x128xf32> to vector<3x128xf32>
    %13 = vector.extract_strided_slice %3 {offsets = [9, 0], sizes = [3, 128], strides = [1, 1]} : vector<27x128xf32> to vector<3x128xf32>
    %14 = vector.extract_strided_slice %3 {offsets = [12, 0], sizes = [3, 128], strides = [1, 1]} : vector<27x128xf32> to vector<3x128xf32>
    %15 = vector.extract_strided_slice %3 {offsets = [15, 0], sizes = [3, 128], strides = [1, 1]} : vector<27x128xf32> to vector<3x128xf32>
    %16 = vector.extract_strided_slice %3 {offsets = [18, 0], sizes = [3, 128], strides = [1, 1]} : vector<27x128xf32> to vector<3x128xf32>
    %17 = vector.extract_strided_slice %3 {offsets = [21, 0], sizes = [3, 128], strides = [1, 1]} : vector<27x128xf32> to vector<3x128xf32>
    %18 = vector.extract_strided_slice %3 {offsets = [24, 0], sizes = [3, 128], strides = [1, 1]} : vector<27x128xf32> to vector<3x128xf32>
    %19 = arith.maximumf %10, %11 : vector<3x128xf32>
    %20 = arith.maximumf %12, %13 : vector<3x128xf32>
    %21 = arith.maximumf %14, %15 : vector<3x128xf32>
    %22 = arith.maximumf %16, %17 : vector<3x128xf32>
    %23 = arith.maximumf %19, %20 : vector<3x128xf32>
    %24 = arith.maximumf %21, %22 : vector<3x128xf32>
    %25 = arith.maximumf %23, %24 : vector<3x128xf32>
    %26 = arith.maximumf %25, %18 : vector<3x128xf32>
    %27 = tpu.concatenate %9, %26 in 0 : vector<13x128xf32>, vector<3x128xf32> -> vector<16x128xf32>
    %c1_i32 = arith.constant 1 : i32
    %28 = arith.muli %arg0, %c1_i32 : i32
    %29 = arith.addi %28, %arg1 : i32
    %c128_i32 = arith.constant 128 : i32
    %30 = arith.muli %29, %c128_i32 : i32
    %c128_i32_6 = arith.constant 128 : i32
    %31 = arith.addi %30, %c128_i32_6 : i32
    %c128_i32_7 = arith.constant 128 : i32
    %32 = arith.cmpi sle, %31, %c128_i32_7 : i32
    %33 = arith.extui %32 : i1 to i32
    %c0_i32_8 = arith.constant 0 : i32
    %34 = arith.cmpi ne, %33, %c0_i32_8 : i32
    scf.if %34 {
      %c0_11 = arith.constant 0 : index
      %c0_12 = arith.constant 0 : index
      %38 = vector.load %arg4[%c0_11, %c0_12] : memref<16x128xf32, #tpu.memory_space<vmem>>, vector<16x128xf32>
      tpu.vector_store %arg4[%c0_11, %c0_12], %27 {strides = array<i32>} : memref<16x128xf32, #tpu.memory_space<vmem>>, vector<16x128xf32>,
      %c0_13 = arith.constant 0 : index
      %c0_14 = arith.constant 0 : index
      %c0_15 = arith.constant 0 : index
      %39 = vector.load %arg5[%c0_13, %c0_14, %c0_15] : memref<1x16x1xf32, #tpu.memory_space<vmem>>, vector<1x16x1xf32>
      %40 = vector.shape_cast %39 : vector<1x16x1xf32> to vector<16x1xf32>
      %cst_16 = arith.constant dense<0.000000e+00> : vector<16xf32>
      %41 = vector.multi_reduction <add>, %27, %cst_16 [1] : vector<16x128xf32> to vector<16xf32>
      %42 = vector.shape_cast %41 : vector<16xf32> to vector<16x1xf32>
      %43 = arith.addf %40, %42 : vector<16x1xf32>
      %c0_17 = arith.constant 0 : index
      %c0_18 = arith.constant 0 : index
      %c0_19 = arith.constant 0 : index
      %44 = vector.load %arg5[%c0_17, %c0_18, %c0_19] : memref<1x16x1xf32, #tpu.memory_space<vmem>>, vector<1x16x1xf32>
      %45 = vector.shape_cast %44 : vector<1x16x1xf32> to vector<16x1xf32>
      %46 = vector.shape_cast %43 : vector<16x1xf32> to vector<1x16x1xf32>
      tpu.vector_store %arg5[%c0_17, %c0_18, %c0_19], %46 {strides = array<i32>} : memref<1x16x1xf32, #tpu.memory_space<vmem>>, vector<1x16x1xf32>,
      %c0_20 = arith.constant 0 : index
      %c0_21 = arith.constant 0 : index
      %c0_22 = arith.constant 0 : index
      %47 = vector.load %arg6[%c0_20, %c0_21, %c0_22] : memref<1x16x1xf32, #tpu.memory_space<vmem>>, vector<1x16x1xf32>
      %48 = vector.shape_cast %47 : vector<1x16x1xf32> to vector<16x1xf32>
      %49 = arith.mulf %27, %27 : vector<16x128xf32>
      %cst_23 = arith.constant dense<0.000000e+00> : vector<16xf32>
      %50 = vector.multi_reduction <add>, %49, %cst_23 [1] : vector<16x128xf32> to vector<16xf32>
      %51 = vector.shape_cast %50 : vector<16xf32> to vector<16x1xf32>
      %52 = arith.addf %48, %51 : vector<16x1xf32>
      %c0_24 = arith.constant 0 : index
      %c0_25 = arith.constant 0 : index
      %c0_26 = arith.constant 0 : index
      %53 = vector.load %arg6[%c0_24, %c0_25, %c0_26] : memref<1x16x1xf32, #tpu.memory_space<vmem>>, vector<1x16x1xf32>
      %54 = vector.shape_cast %53 : vector<1x16x1xf32> to vector<16x1xf32>
      %55 = vector.shape_cast %52 : vector<16x1xf32> to vector<1x16x1xf32>
      tpu.vector_store %arg6[%c0_24, %c0_25, %c0_26], %55 {strides = array<i32>} : memref<1x16x1xf32, #tpu.memory_space<vmem>>, vector<1x16x1xf32>,
    } else {
    }
    %c128_i32_9 = arith.constant 128 : i32
    %35 = arith.cmpi sgt, %31, %c128_i32_9 : i32
    %36 = arith.extui %35 : i1 to i32
    %c0_i32_10 = arith.constant 0 : i32
    %37 = arith.cmpi ne, %36, %c0_i32_10 : i32
    scf.if %37 {
      %38 = tpu.iota {dimensions = array<i32: 1>} : vector<16x128xi32>
      %39 = vector.broadcast %30 : i32 to vector<16x128xi32>
      %40 = arith.addi %39, %38 : vector<16x128xi32>
      %c128_i32_11 = arith.constant 128 : i32
      %41 = vector.broadcast %c128_i32_11 : i32 to vector<16x128xi32>
      %42 = arith.cmpi slt, %40, %41 : vector<16x128xi32>
      %cst_12 = arith.constant 0.000000e+00 : f32
      %43 = vector.broadcast %cst_12 : f32 to vector<16x128xf32>
      %44 = arith.select %42, %27, %43 : vector<16x128xi1>, vector<16x128xf32>
      %c0_13 = arith.constant 0 : index
      %c0_14 = arith.constant 0 : index
      %45 = vector.load %arg4[%c0_13, %c0_14] : memref<16x128xf32, #tpu.memory_space<vmem>>, vector<16x128xf32>
      tpu.vector_store %arg4[%c0_13, %c0_14], %44 {strides = array<i32>} : memref<16x128xf32, #tpu.memory_space<vmem>>, vector<16x128xf32>,
      %c0_15 = arith.constant 0 : index
      %c0_16 = arith.constant 0 : index
      %c0_17 = arith.constant 0 : index
      %46 = vector.load %arg5[%c0_15, %c0_16, %c0_17] : memref<1x16x1xf32, #tpu.memory_space<vmem>>, vector<1x16x1xf32>
      %47 = vector.shape_cast %46 : vector<1x16x1xf32> to vector<16x1xf32>
      %cst_18 = arith.constant dense<0.000000e+00> : vector<16xf32>
      %48 = vector.multi_reduction <add>, %44, %cst_18 [1] : vector<16x128xf32> to vector<16xf32>
      %49 = vector.shape_cast %48 : vector<16xf32> to vector<16x1xf32>
      %50 = arith.addf %47, %49 : vector<16x1xf32>
      %c0_19 = arith.constant 0 : index
      %c0_20 = arith.constant 0 : index
      %c0_21 = arith.constant 0 : index
      %51 = vector.load %arg5[%c0_19, %c0_20, %c0_21] : memref<1x16x1xf32, #tpu.memory_space<vmem>>, vector<1x16x1xf32>
      %52 = vector.shape_cast %51 : vector<1x16x1xf32> to vector<16x1xf32>
      %53 = vector.shape_cast %50 : vector<16x1xf32> to vector<1x16x1xf32>
      tpu.vector_store %arg5[%c0_19, %c0_20, %c0_21], %53 {strides = array<i32>} : memref<1x16x1xf32, #tpu.memory_space<vmem>>, vector<1x16x1xf32>,
      %c0_22 = arith.constant 0 : index
      %c0_23 = arith.constant 0 : index
      %c0_24 = arith.constant 0 : index
      %54 = vector.load %arg6[%c0_22, %c0_23, %c0_24] : memref<1x16x1xf32, #tpu.memory_space<vmem>>, vector<1x16x1xf32>
      %55 = vector.shape_cast %54 : vector<1x16x1xf32> to vector<16x1xf32>
      %56 = arith.mulf %44, %44 : vector<16x128xf32>
      %cst_25 = arith.constant dense<0.000000e+00> : vector<16xf32>
      %57 = vector.multi_reduction <add>, %56, %cst_25 [1] : vector<16x128xf32> to vector<16xf32>
      %58 = vector.shape_cast %57 : vector<16xf32> to vector<16x1xf32>
      %59 = arith.addf %55, %58 : vector<16x1xf32>
      %c0_26 = arith.constant 0 : index
      %c0_27 = arith.constant 0 : index
      %c0_28 = arith.constant 0 : index
      %60 = vector.load %arg6[%c0_26, %c0_27, %c0_28] : memref<1x16x1xf32, #tpu.memory_space<vmem>>, vector<1x16x1xf32>
      %61 = vector.shape_cast %60 : vector<1x16x1xf32> to vector<16x1xf32>
      %62 = vector.shape_cast %59 : vector<16x1xf32> to vector<1x16x1xf32>
      tpu.vector_store %arg6[%c0_26, %c0_27, %c0_28], %62 {strides = array<i32>} : memref<1x16x1xf32, #tpu.memory_space<vmem>>, vector<1x16x1xf32>,
    } else {
    }
    return
  }
  func.func @transform_0(%arg0: i32, %arg1: i32) -> (i32, i32) {
    %c1_i32 = arith.constant 1 : i32
    %0 = arith.muli %arg0, %c1_i32 : i32
    %1 = arith.addi %0, %arg1 : i32
    %c0_i32 = arith.constant 0 : i32
    %c0_i32_0 = arith.constant 0 : i32
    return %c0_i32, %1 : i32, i32
  }
  func.func @transform_1(%arg0: i32, %arg1: i32) -> (i32, i32) {
    %c0_i32 = arith.constant 0 : i32
    %c0_i32_0 = arith.constant 0 : i32
    %c0_i32_1 = arith.constant 0 : i32
    return %c0_i32, %c0_i32_0 : i32, i32
  }
  func.func @transform_2(%arg0: i32, %arg1: i32) -> (i32, i32) {
    %c1_i32 = arith.constant 1 : i32
    %0 = arith.muli %arg0, %c1_i32 : i32
    %1 = arith.addi %0, %arg1 : i32
    %c0_i32 = arith.constant 0 : i32
    %c0_i32_0 = arith.constant 0 : i32
    return %c0_i32, %1 : i32, i32
  }
  func.func @transform_3(%arg0: i32, %arg1: i32) -> (i32, i32, i32) {
    %c0_i32 = arith.constant 0 : i32
    %c0_i32_0 = arith.constant 0 : i32
    %c0_i32_1 = arith.constant 0 : i32
    return %arg0, %c0_i32, %c0_i32_0 : i32, i32, i32
  }
  func.func @transform_4(%arg0: i32, %arg1: i32) -> (i32, i32, i32) {
    %c0_i32 = arith.constant 0 : i32
    %c0_i32_0 = arith.constant 0 : i32
    %c0_i32_1 = arith.constant 0 : i32
    return %arg0, %c0_i32, %c0_i32_0 : i32, i32, i32
  }
}

</mosaic_0001>

<llo_original>
// kernel: initial_block_forward.1
$region0: #{initial_block_forward.1}
  #allocation0 [shape = 'u32[]', space=smem, size = 0x4, offset = 0x4, fixed_abs, tag = 'smem constant byte address 0x4 - core index']
  #allocation1 [shape = 'u32[144,128]{1,0:T(1,128)}', space=vmem, size = 0x12000, scoped, tag = 'internal scratch']
  %s0 = inlined_call_operand.vmem [shape: f32[27,256], index: 0, kind: input, shape index: {}]
  %s1 = inlined_call_operand.vmem [shape: f32[13,27], index: 1, kind: input, shape index: {}]
  %s2 = inlined_call_operand.vmem [shape: f32[16,256], index: 2, kind: output, shape index: {0}]
  %s3 = inlined_call_operand.vmem [shape: f32[2,16,1], index: 3, kind: output, shape index: {1}]
  %s4 = inlined_call_operand.vmem [shape: f32[2,16,1], index: 4, kind: output, shape index: {2}]
  %5 = xla_tuple %s2, %s3, %s4
  %s6 = sld [smem:[#allocation0]]
  $region141: #{initial_block_forward.1} parent=0
    _
  %s8 = ssub.s32 1, %s6
  %s9 = scalar_select 0, %s8, %s6
  $region1: #{initial_block_forward.1} parent=0
    #allocation2 [shape = 'u8[32768]{0}', space=vmem, size = 0x8000, scoped, tag = 'input window, operand 0']
    #allocation3 [shape = 'u8[16384]{0}', space=vmem, size = 0x4000, scoped, tag = 'output window, operand 0']
    loop: start=0, step=1, limit=4
    $region2: #{initial_block_forward.1} parent=1 // loop_pre_header
      _
    $region3: #{initial_block_forward.1} parent=1 // loop_header
      %s11 = sphi 0, %s15
      %p12 = scmp.ge.s32.totalorder %s11, 4
      %s18 = sphi 0, %s30
      %s19 = sphi 0, %s26
      %s20 = sphi 0, %s18
      %s21 = sphi 0, %s19
      %s22 = sphi 0, %s20
      %s23 = sphi 0, %s21
      %s35 = sphi 0, %s37
      %s38 = sphi 0, %s35
      %s39 = sphi 0, %s38
      %s55 = sphi 0, %s39
      %s59 = sphi 0, %s59
      %s61 = sphi 0, %s59
      %s62 = sphi 0, %s61
      %s76 = sphi 0, %s62
      %s84 = sphi 0, %s86
      %s87 = sphi 0, %s84
      %s88 = sphi 0, %s87
      %s104 = sphi 0, %s88
      %s110 = sphi 0, %s112
      %s113 = sphi 0, %s110
      %s114 = sphi 0, %s113
      %s130 = sphi 0, %s114
      %s136 = sphi 0, %s138
      %s139 = sphi 0, %s136
      %s140 = sphi 0, %s139
      %s156 = sphi 0, %s140
    $region4: #{initial_block_forward.1} parent=1 // loop_header_branch
      %14 = sbr.rel (%p12) target = $region8
    $region5: #{initial_block_forward.1} parent=1 // loop_body
      %s16 = ssub.s32 %s11, 1
      %s17 = ssub.s32 %s11, 2
      %s24 = sadd.s32 1, %s19
      %p25 = scmp.ge.s32.totalorder %s24, 1
      %s26 = scalar_select %p25, 0, %s24
      %s27 = sadd.s32 1, %s18
      %s28 = scalar_select %p25, %s27, %s18
      %p29 = scmp.ge.s32.totalorder %s28, 2
      %s30 = scalar_select %p29, 0, %s28
      %s31 = sadd.s32 %s18, %s19
      %s32 = sadd.s32 %s30, %s26
      %s33 = ssub.s32 %s31, %s32
      %p34 = scmp.eq.s32.totalorder %s33, 0
      %s36 = sadd.s32 %s35, 1
      %s37 = scalar_select %p34, %s35, %s36
      %p40 = pneg %p34
      %p41 = scmp.eq.s32.totalorder %s11, 1
      %p42 = por %p40, %p41
      %p43 = scmp.ne.s32.totalorder %s35, %s38
      %p44 = scmp.eq.s32.totalorder %s11, 0
      %p45 = por %p43, %p44
      %p46 = scmp.ne.s32.totalorder %s35, %s38
      %p47 = scmp.eq.s32.totalorder %s16, 1
      %p48 = por %p46, %p47
      %p49 = scmp.ne.s32.totalorder %s38, %s39
      %p50 = scmp.eq.s32.totalorder %s16, 0
      %p51 = por %p49, %p50
      %p52 = scmp.ne.s32.totalorder %s38, %s39
      %p53 = scmp.eq.s32.totalorder %s17, 1
      %p54 = por %p52, %p53
      %p56 = scmp.ne.s32.totalorder %s39, %s55
      %p57 = scmp.eq.s32.totalorder %s17, 0
      %p58 = por %p56, %p57
      %s60 = sadd.s32 %s59, 1
      %p63 = scmp.eq.s32.totalorder %s11, 1
      %p64 = scmp.ne.s32.totalorder %s59, %s61
      %p65 = scmp.eq.s32.totalorder %s11, 0
      %p66 = por %p64, %p65
      %p67 = scmp.ne.s32.totalorder %s59, %s61
      %p68 = scmp.eq.s32.totalorder %s16, 1
      %p69 = por %p67, %p68
      %p70 = scmp.ne.s32.totalorder %s61, %s62
      %p71 = scmp.eq.s32.totalorder %s16, 0
      %p72 = por %p70, %p71
      %p73 = scmp.ne.s32.totalorder %s61, %s62
      %p74 = scmp.eq.s32.totalorder %s17, 1
      %p75 = por %p73, %p74
      %p77 = scmp.ne.s32.totalorder %s62, %s76
      %p78 = scmp.eq.s32.totalorder %s17, 0
      %p79 = por %p77, %p78
      %s80 = sadd.s32 %s18, %s19
      %s81 = sadd.s32 %s30, %s26
      %s82 = ssub.s32 %s80, %s81
      %p83 = scmp.eq.s32.totalorder %s82, 0
      %s85 = sadd.s32 %s84, 1
      %s86 = scalar_select %p83, %s84, %s85
      %p89 = pneg %p83
      %p90 = scmp.eq.s32.totalorder %s11, 1
      %p91 = por %p89, %p90
      %p92 = scmp.ne.s32.totalorder %s84, %s87
      %p93 = scmp.eq.s32.totalorder %s11, 0
      %p94 = por %p92, %p93
      %p95 = scmp.ne.s32.totalorder %s84, %s87
      %p96 = scmp.eq.s32.totalorder %s16, 1
      %p97 = por %p95, %p96
      %p98 = scmp.ne.s32.totalorder %s87, %s88
      %p99 = scmp.eq.s32.totalorder %s16, 0
      %p100 = por %p98, %p99
      %p101 = scmp.ne.s32.totalorder %s87, %s88
      %p102 = scmp.eq.s32.totalorder %s17, 1
      %p103 = por %p101, %p102
      %p105 = scmp.ne.s32.totalorder %s88, %s104
      %p106 = scmp.eq.s32.totalorder %s17, 0
      %p107 = por %p105, %p106
      %s108 = ssub.s32 %s18, %s30
      %p109 = scmp.eq.s32.totalorder %s108, 0
      %s111 = sadd.s32 %s110, 1
      %s112 = scalar_select %p109, %s110, %s111
      %p115 = pneg %p109
      %p116 = scmp.eq.s32.totalorder %s11, 1
      %p117 = por %p115, %p116
      %p118 = scmp.ne.s32.totalorder %s110, %s113
      %p119 = scmp.eq.s32.totalorder %s11, 0
      %p120 = por %p118, %p119
      %p121 = scmp.ne.s32.totalorder %s110, %s113
      %p122 = scmp.eq.s32.totalorder %s16, 1
      %p123 = por %p121, %p122
      %p124 = scmp.ne.s32.totalorder %s113, %s114
      %p125 = scmp.eq.s32.totalorder %s16, 0
      %p126 = por %p124, %p125
      %p127 = scmp.ne.s32.totalorder %s113, %s114
      %p128 = scmp.eq.s32.totalorder %s17, 1
      %p129 = por %p127, %p128
      %p131 = scmp.ne.s32.totalorder %s114, %s130
      %p132 = scmp.eq.s32.totalorder %s17, 0
      %p133 = por %p131, %p132
      %s134 = ssub.s32 %s18, %s30
      %p135 = scmp.eq.s32.totalorder %s134, 0
      %s137 = sadd.s32 %s136, 1
      %s138 = scalar_select %p135, %s136, %s137
      %p141 = pneg %p135
      %p142 = scmp.eq.s32.totalorder %s11, 1
      %p143 = por %p141, %p142
      %p144 = scmp.ne.s32.totalorder %s136, %s139
      %p145 = scmp.eq.s32.totalorder %s11, 0
      %p146 = por %p144, %p145
      %p147 = scmp.ne.s32.totalorder %s136, %s139
      %p148 = scmp.eq.s32.totalorder %s16, 1
      %p149 = por %p147, %p148
      %p150 = scmp.ne.s32.totalorder %s139, %s140
      %p151 = scmp.eq.s32.totalorder %s16, 0
      %p152 = por %p150, %p151
      %p153 = scmp.ne.s32.totalorder %s139, %s140
      %p154 = scmp.eq.s32.totalorder %s17, 1
      %p155 = por %p153, %p154
      %p157 = scmp.ne.s32.totalorder %s140, %s156
      %p158 = scmp.eq.s32.totalorder %s17, 0
      %p159 = por %p157, %p158
      %p160 = scmp.le.s32.totalorder 1, %s11
      %p161 = scmp.lt.s32.totalorder %s11, 3
      %p162 = pnand %p160, %p161
      %p163 = pneg %p162
      // Predicated region
      $region9: #{initial_block_forward.1} parent=5 // pred_check
        _
      $region10: #{initial_block_forward.1} parent=5 // pred_check_branch
        %165 = sbr.rel (%p162) target = $region12
      $region11: #{initial_block_forward.1} parent=5 // pred_region
        %s166 = ssub.s32 %s11, 1
        // Predicated region
        $region13: #{initial_block_forward.1} parent=11 // pred_check
          %p167 = pneg %p72
        $region14: #{initial_block_forward.1} parent=11 // pred_check_branch
          %169 = sbr.rel (%p167) target = $region16
        $region15: #{initial_block_forward.1} parent=11 // pred_region
          _
        $region16: #{initial_block_forward.1} parent=11 // pred_fallthru
          _
      $region12: #{initial_block_forward.1} parent=5 // pred_fallthru
        _
      %p170 = scmp.lt.s32.totalorder %s11, 2
      // Predicated region
      $region17: #{initial_block_forward.1} parent=5 // pred_check
        %p171 = pneg %p170
      $region18: #{initial_block_forward.1} parent=5 // pred_check_branch
        %173 = sbr.rel (%p171) target = $region20
      $region19: #{initial_block_forward.1} parent=5 // pred_region
        // Predicated region
        $region21: #{initial_block_forward.1} parent=19 // pred_check
          %p174 = pneg %p45
        $region22: #{initial_block_forward.1} parent=19 // pred_check_branch
          %176 = sbr.rel (%p174) target = $region24
        $region23: #{initial_block_forward.1} parent=19 // pred_region
          %s177 = sand.u32 %s35, 1
          %s178 = sand.u32 %s35, 1
          %s179 = smul.addr %s178, 32
          %s180 = scalar_lea.vmem [#allocation2], %s179
          %s181 = sadd.s32 %s18, %s19
          %s182 = smul.addr %s181, 8
          %s183 = scalar_lea.vmem %s0, %s182
          // Predicated region
          $region25: #{initial_block_forward.1} parent=23 // pred_check
            _
          $region26: #{initial_block_forward.1} parent=23 // pred_check_branch
            %185 = sbr.rel (0) target = $region28
          $region27: #{initial_block_forward.1} parent=23 // pred_region
            // Predicated region
            $region29: #{initial_block_forward.1} parent=27 // pred_check
              _
            $region30: #{initial_block_forward.1} parent=27 // pred_check_branch
              %187 = sbr.rel (0) target = $region32
            $region31: #{initial_block_forward.1} parent=27 // pred_region
              // Predicated region
              $region44: #{initial_block_forward.1} parent=31 // pred_check
                _
              $region45: #{initial_block_forward.1} parent=31 // pred_check_branch
                %209 = sbr.rel (0) target = $region47
              $region46: #{initial_block_forward.1} parent=31 // pred_region
                loop: start=0, step=1, limit=1
                $region48: #{initial_block_forward.1} parent=46 // loop_pre_header
                  _
                $region49: #{initial_block_forward.1} parent=46 // loop_header
                  %s211 = sphi 0, %s215
                  %p212 = scmp.ge.s32.totalorder %s211, 1
                  %s216 = sphi %s183, %s183
                  %s217 = sphi %s180, %s180
                $region50: #{initial_block_forward.1} parent=46 // loop_header_branch
                  %214 = sbr.rel (%p212) target = $region54
                $region51: #{initial_block_forward.1} parent=46 // loop_body
                  %v218 = vld [vmem:[%s216] sm:$0xff]
                  %219 = vst [vmem:[%s217] sm:$0xff] %v218
                  %v220 = vld [vmem:[%s216 + $0x10] sm:$0xff]
                  %221 = vst [vmem:[%s217 + $0x8] sm:$0xff] %v220
                  %v222 = vld [vmem:[%s216 + $0x20] sm:$0xff]
                  %223 = vst [vmem:[%s217 + $0x10] sm:$0xff] %v222
                  %v224 = vld [vmem:[%s216 + $0x30] sm:$0xff]
                  %225 = vst [vmem:[%s217 + $0x18] sm:$0xff] %v224
                $region52: #{initial_block_forward.1} parent=46 // loop_footer
                  %s215 = sadd.s32 1, %s211
                $region53: #{initial_block_forward.1} parent=46 // loop_footer_branch
                  %210 = sbr.rel target = $region49
                $region54: #{initial_block_forward.1} parent=46 // loop_exit
                  _
              $region47: #{initial_block_forward.1} parent=31 // pred_fallthru
                _
              // Predicated region
              $region55: #{initial_block_forward.1} parent=31 // pred_check
                _
              $region56: #{initial_block_forward.1} parent=31 // pred_check_branch
                %227 = sbr.rel target = $region58
              $region57: #{initial_block_forward.1} parent=31 // pred_region
                _
              $region58: #{initial_block_forward.1} parent=31 // pred_fallthru
                _
            $region32: #{initial_block_forward.1} parent=27 // pred_fallthru
              _
            // Predicated region
            $region33: #{initial_block_forward.1} parent=27 // pred_check
              _
            $region34: #{initial_block_forward.1} parent=27 // pred_check_branch
              %189 = sbr.rel target = $region36
            $region35: #{initial_block_forward.1} parent=27 // pred_region
              %s191 = ssub.s32 256, 1
              loop: start=0, step=1, limit=1
              $region37: #{initial_block_forward.1} parent=35 // loop_pre_header
                _
              $region38: #{initial_block_forward.1} parent=35 // loop_header
                %s193 = sphi 0, %s197
                %p194 = scmp.ge.s32.totalorder %s193, 1
                %s198 = sphi %s183, %s183
                %s199 = sphi %s180, %s180
              $region39: #{initial_block_forward.1} parent=35 // loop_header_branch
                %196 = sbr.rel (%p194) target = $region43
              $region40: #{initial_block_forward.1} parent=35 // loop_body
                %v200 = vld [vmem:[%s198] sm:%s191]
                %201 = vst [vmem:[%s199] sm:%s191] %v200
                %v202 = vld [vmem:[%s198 + $0x10] sm:%s191]
                %203 = vst [vmem:[%s199 + $0x8] sm:%s191] %v202
                %v204 = vld [vmem:[%s198 + $0x20] sm:%s191]
                %205 = vst [vmem:[%s199 + $0x10] sm:%s191] %v204
                %v206 = vld [vmem:[%s198 + $0x30] sm:%s191]
                %207 = vst [vmem:[%s199 + $0x18] sm:%s191] %v206
              $region41: #{initial_block_forward.1} parent=35 // loop_footer
                %s197 = sadd.s32 1, %s193
              $region42: #{initial_block_forward.1} parent=35 // loop_footer_branch
                %192 = sbr.rel target = $region38
              $region43: #{initial_block_forward.1} parent=35 // loop_exit
                _
            $region36: #{initial_block_forward.1} parent=27 // pred_fallthru
              _
          $region28: #{initial_block_forward.1} parent=23 // pred_fallthru
            _
          %228 = vnop
        $region24: #{initial_block_forward.1} parent=19 // pred_fallthru
          _
      $region20: #{initial_block_forward.1} parent=5 // pred_fallthru
        _
      %p229 = scmp.le.s32.totalorder 1, %s11
      %p230 = scmp.lt.s32.totalorder %s11, 3
      %p231 = pnand %p229, %p230
      %p232 = pneg %p231
      // Predicated region
      $region59: #{initial_block_forward.1} parent=5 // pred_check
        _
      $region60: #{initial_block_forward.1} parent=5 // pred_check_branch
        %234 = sbr.rel (%p231) target = $region62
      $region61: #{initial_block_forward.1} parent=5 // pred_region
        %s235 = ssub.s32 %s11, 1
        %s236 = sand.u32 %s38, 1
        %s237 = sand.u32 %s38, 1
        %s238 = smul.addr %s237, 32
        %s239 = scalar_lea.vmem [#allocation2], %s238
        // Predicated region
        $region63: #{initial_block_forward.1} parent=61 // pred_check
          %p240 = pneg %p51
        $region64: #{initial_block_forward.1} parent=61 // pred_check_branch
          %242 = sbr.rel (%p240) target = $region66
        $region65: #{initial_block_forward.1} parent=61 // pred_region
          _
        $region66: #{initial_block_forward.1} parent=61 // pred_fallthru
          _
        %s243 = sand.u32 %s38, 1
        %s244 = sand.u32 %s38, 1
        %s245 = smul.addr %s244, 32
        %s246 = scalar_lea.vmem [#allocation2], %s245
        %p247 = pneg %p51
        %p248 = pneg %p48
        %p249 = pneg %p72
        %p250 = pneg %p69
        %p251 = pneg %p100
        %p252 = pneg %p97
        %s253 = sand.u32 %s87, 1
        %s254 = sand.u32 %s87, 1
        %s255 = smul.addr %s254, 16
        %s256 = scalar_lea.vmem [#allocation3], %s255
        %p257 = pneg %p126
        %p258 = pneg %p123
        %p259 = scmp.lt.s32.totalorder %s20, 1
        %s260 = scalar_select %p259, %s20, 1
        %s261 = smul.addr %s260, 2
        %s262 = smul.addr %s261, 8
        %s263 = scalar_lea.vmem %s3, %s262
        %p264 = pneg %p152
        %p265 = pneg %p149
        %p266 = scmp.lt.s32.totalorder %s20, 1
        %s267 = scalar_select %p266, %s20, 1
        %s268 = smul.addr %s267, 2
        %s269 = smul.addr %s268, 8
        %s270 = scalar_lea.vmem %s4, %s269
        %s271 = sadd.s32 %s20, %s21
        %s272 = sadd.s32 %s20, %s21
        %p273 = scmp.lt.s32.totalorder %s20, 1
        %s274 = scalar_select %p273, %s20, 1
        %s275 = smul.addr %s274, 2
        %s276 = smul.addr %s275, 8
        %s277 = scalar_lea.vmem %s3, %s276
        %p278 = scmp.lt.s32.totalorder %s20, 1
        %s279 = scalar_select %p278, %s20, 1
        %s280 = smul.addr %s279, 2
        %s281 = smul.addr %s280, 8
        %s282 = scalar_lea.vmem %s4, %s281
        %p283 = scmp.eq.s32.totalorder %s21, 0
        // Predicated region
        $region67: #{initial_block_forward.1} parent=61 // pred_check
          %p284 = pneg %p283
        $region68: #{initial_block_forward.1} parent=61 // pred_check_branch
          %286 = sbr.rel (%p284) target = $region70
        $region69: #{initial_block_forward.1} parent=61 // pred_region
          %vm287 = vcmask 7168
          %288 = vst.msk [vmem:[%s277] sm:$0xff] %vm287, 0.0
          %289 = vst.msk [vmem:[%s277 + $0x8] sm:$0xff] %vm287, 0.0
          %290 = vst.msk [vmem:[%s282] sm:$0xff] %vm287, 0.0
          %291 = vst.msk [vmem:[%s282 + $0x8] sm:$0xff] %vm287, 0.0
        $region70: #{initial_block_forward.1} parent=61 // pred_fallthru
          _
        %v292 = vld [vmem:[%s239] sm:$0xff]
        %v293 = vld [vmem:[%s239 + $0x8] sm:$0xff]
        %v294 = vld [vmem:[%s239 + $0x10] sm:$0xff]
        %v295 = vld [vmem:[%s239 + $0x18] sm:$0x7]
        %vm296 = vcmp.eq.f32.partialorder %v292, -inf
        %vm297 = vcmp.eq.f32.partialorder %v293, -inf
        %vm298 = vcmp.eq.f32.partialorder %v294, -inf
        %vm299 = vcmp.eq.f32.partialorder %v295, -inf
        %v300 = vsel %vm296, 0.0, %v292
        %v301 = vsel %vm297, 0.0, %v293
        %v302 = vsel %vm298, 0.0, %v294
        %v303 = vsel %vm299, 0.0, %v295
        %v304 = vld [vmem:[%s1] sm:$0xff]
        %v305 = vld [vmem:[%s1 + $0x8] sm:$0x1f]
        %vm306 = vcmask 220160
        %v308 = vsel %vm306, %v304, 0
        %v311 = vsel %vm306, %v305, 0
        %vm313 = vcmask 1042432
        %v315 = vsel %vm313, %v303, 0
        %317 = vmatprep.subr.mxu0 0.0
        %318 = vmatpush1.msra.mxu0 0.0
        %319 = vmatprep.subr.mxu0 0.0
        %320 = vmatpush1.msra.mxu0 0.0
        %321 = vmatprep.subr.mxu0 0.0
        %322 = vmatpush1.msra.mxu0 0.0
        %323 = vmatprep.subr.mxu0 0.0
        %324 = vmatpush1.msra.mxu0 0.0
        %325 = vmatprep.subr.mxu0 0.0
        %326 = vmatpush1.msra.mxu0 0.0
        %327 = vmatprep.subr.mxu0 0.0
        %328 = vmatpush1.msra.mxu0 0.0
        %329 = vmatprep.subr.mxu0 0.0
        %330 = vmatpush1.msra.mxu0 0.0
        %331 = vmatprep.subr.mxu0 0.0
        %332 = vmatpush1.msra.mxu0 0.0
        %333 = vmatprep.subr.mxu0 0.0
        %334 = vmatpush1.msra.mxu0 0.0
        %335 = vmatprep.subr.mxu0 0.0
        %336 = vmatpush1.msra.mxu0 0.0
        %337 = vmatprep.subr.mxu0 0.0
        %338 = vmatpush1.msra.mxu0 0.0
        %339 = vmatprep.subr.mxu0 0.0
        %340 = vmatpush1.msra.mxu0 0.0
        %341 = vmatprep.subr.mxu0 0.0
        %342 = vmatpush1.msra.mxu0 %v315
        %343 = vmatprep.subr.mxu0 0.0
        %344 = vmatpush1.msra.mxu0 %v302
        %345 = vmatprep.subr.mxu0 0.0
        %346 = vmatpush1.msra.mxu0 %v301
        %347 = vmatprep.subr.mxu0 0.0
        %348 = vmatpush1.msra.mxu0 %v300
        %349 = vmatprep.subr.mxu0 0.0
        %350 = vmatpush2.msra.mxu0 0.0
        %351 = vmatprep.subr.mxu0 0.0
        %352 = vmatpush2.msra.mxu0 0.0
        %353 = vmatprep.subr.mxu0 0.0
        %354 = vmatpush2.msra.mxu0 0.0
        %355 = vmatprep.subr.mxu0 0.0
        %356 = vmatpush2.msra.mxu0 0.0
        %357 = vmatprep.subr.mxu0 0.0
        %358 = vmatpush2.msra.mxu0 0.0
        %359 = vmatprep.subr.mxu0 0.0
        %360 = vmatpush2.msra.mxu0 0.0
        %361 = vmatprep.subr.mxu0 0.0
        %362 = vmatpush2.msra.mxu0 0.0
        %363 = vmatprep.subr.mxu0 0.0
        %364 = vmatpush2.msra.mxu0 0.0
        %365 = vmatprep.subr.mxu0 0.0
        %366 = vmatpush2.msra.mxu0 0.0
        %367 = vmatprep.subr.mxu0 0.0
        %368 = vmatpush2.msra.mxu0 0.0
        %369 = vmatprep.subr.mxu0 0.0
        %370 = vmatpush2.msra.mxu0 0.0
        %371 = vmatprep.subr.mxu0 0.0
        %372 = vmatpush2.msra.mxu0 0.0
        %373 = vmatprep.subr.mxu0 0.0
        %374 = vmatpush2.msra.mxu0 0.0
        %375 = vmatprep.subr.mxu0 0.0
        %376 = vmatpush2.msra.mxu0 0.0
        %377 = vmatprep.subr.mxu0 0.0
        %378 = vmatpush2.msra.mxu0 0.0
        %379 = vmatprep.subr.mxu0 0.0
        %380 = vmatpush2.msra.mxu0 0.0
        %381 = vmatprep.mubr.f32.mxu0 0.0
        %382 = vmatmul.mubr.f32.gmra.mxu0 %v308
        %v383 = vpop.f32.mrf.mxu0
        %v384 = vadd.f32 0.0, %v383
        %v385 = vpop.f32.mrf.mxu0
        %386 = vmatprep.mubr.f32.mxu0 0.0
        %387 = vmatmul.mubr.f32.gmra.mxu0 %v311
        %v388 = vpop.f32.mrf.mxu0
        %v389 = vadd.f32 0.0, %v388
        %v390 = vpop.f32.mrf.mxu0
        %391 = vdwg.mxu0
        %v393 = vrot.slane %v292, 3
        %v395 = vmax.f32 %v292, %v393
        %v397 = vrot.slane %v293, 3
        %v399 = vmax.f32 %v292, %v397
        %v400 = vmax.f32 %v293, %v397
        %vm402 = vcmask 1044480
        %v403 = vrot.slane %v294, 3
        %v404 = vsel %vm402, %v397, %v403
        %v406 = vmax.f32 %v293, %v404
        %v408 = vmax.f32 %v294, %v403
        %vm411 = vcmask 1041408
        %v412 = vrot.slane %v399, 6
        %v413 = vrot.slane %v400, 6
        %v414 = vsel %vm411, %v412, %v413
        %v416 = vmax.f32 %v395, %v414
        %v418 = vrot.slane %v408, 6
        %v420 = vmax.f32 %v406, %v418
        %v422 = vrot.slane %v420, 4
        %v424 = vmax.f32 %v416, %v422
        %v425 = vmax.f32 %v424, %v295
        %v427 = vrot.slane %v425, 3
        %v429 = vsel %vm402, %v389, %v427
        %s430 = sadd.s32 %s20, %s21
        %s431 = smul.u32 %s430, 128
        %s432 = sadd.s32 %s431, 128
        %p433 = scmp.le.s32.totalorder %s432, 128
        // Predicated region
        $region71: #{initial_block_forward.1} parent=61 // pred_check
          %p434 = pneg %p433
        $region72: #{initial_block_forward.1} parent=61 // pred_check_branch
          %436 = sbr.rel (%p434) target = $region74
        $region73: #{initial_block_forward.1} parent=61 // pred_region
          %437 = vst [vmem:[%s256] sm:$0xff] %v384
          %438 = vst [vmem:[%s256 + $0x8] sm:$0xff] %v429
          %v439 = vld [vmem:[%s277] sm:$0xff]
          %v440 = vld [vmem:[%s277 + $0x8] sm:$0xff]
          %441 = vadd.xlane.f32.xlu0 %v384
          %v442 = vpop.xlane.xlu0 %441
          %443 = vadd.xlane.f32.xlu0 %v429
          %v444 = vpop.xlane.xlu0 %443
          %v445 = vadd.f32 %v439, %v442
          %v446 = vadd.f32 %v440, %v444
          %vm447 = vcmask 7168
          %448 = vst.msk [vmem:[%s277] sm:$0xff] %vm447, %v445
          %449 = vst.msk [vmem:[%s277 + $0x8] sm:$0xff] %vm447, %v446
          %v450 = vld [vmem:[%s282] sm:$0xff]
          %v451 = vld [vmem:[%s282 + $0x8] sm:$0xff]
          %v452 = vmul.f32 %v384, %v384
          %v453 = vmul.f32 %v429, %v429
          %454 = vadd.xlane.f32.xlu0 %v452
          %v455 = vpop.xlane.xlu0 %454
          %456 = vadd.xlane.f32.xlu0 %v453
          %v457 = vpop.xlane.xlu0 %456
          %v458 = vadd.f32 %v450, %v455
          %v459 = vadd.f32 %v451, %v457
          %460 = vst.msk [vmem:[%s282] sm:$0xff] %vm447, %v458
          %461 = vst.msk [vmem:[%s282 + $0x8] sm:$0xff] %vm447, %v459
        $region74: #{initial_block_forward.1} parent=61 // pred_fallthru
          _
        %p462 = scmp.gt.s32.totalorder %s432, 128
        // Predicated region
        $region75: #{initial_block_forward.1} parent=61 // pred_check
          %p463 = pneg %p462
        $region76: #{initial_block_forward.1} parent=61 // pred_check_branch
          %465 = sbr.rel (%p463) target = $region78
        $region77: #{initial_block_forward.1} parent=61 // pred_region
          %v466 = vlaneseq
          %v467 = vand.u32 %v466, 127
          %v468 = vstv %s431
          %v469 = vadd.s32 %v468, %v467
          %vm470 = vcmp.lt.s32.totalorder %v469, 128
          %v471 = vsel %vm470, %v384, 0.0
          %v472 = vsel %vm470, %v429, 0.0
          %473 = vst [vmem:[%s256] sm:$0xff] %v471
          %474 = vst [vmem:[%s256 + $0x8] sm:$0xff] %v472
          %v475 = vld [vmem:[%s277] sm:$0xff]
          %v476 = vld [vmem:[%s277 + $0x8] sm:$0xff]
          %477 = vadd.xlane.f32.xlu0 %v471
          %v478 = vpop.xlane.xlu0 %477
          %479 = vadd.xlane.f32.xlu0 %v472
          %v480 = vpop.xlane.xlu0 %479
          %v481 = vadd.f32 %v475, %v478
          %v482 = vadd.f32 %v476, %v480
          %vm483 = vcmask 7168
          %484 = vst.msk [vmem:[%s277] sm:$0xff] %vm483, %v481
          %485 = vst.msk [vmem:[%s277 + $0x8] sm:$0xff] %vm483, %v482
          %v486 = vld [vmem:[%s282] sm:$0xff]
          %v487 = vld [vmem:[%s282 + $0x8] sm:$0xff]
          %v488 = vmul.f32 %v471, %v471
          %v489 = vmul.f32 %v472, %v472
          %490 = vadd.xlane.f32.xlu0 %v488
          %v491 = vpop.xlane.xlu0 %490
          %492 = vadd.xlane.f32.xlu0 %v489
          %v493 = vpop.xlane.xlu0 %492
          %v494 = vadd.f32 %v486, %v491
          %v495 = vadd.f32 %v487, %v493
          %496 = vst.msk [vmem:[%s282] sm:$0xff] %vm483, %v494
          %497 = vst.msk [vmem:[%s282 + $0x8] sm:$0xff] %vm483, %v495
        $region78: #{initial_block_forward.1} parent=61 // pred_fallthru
          _
        %s498 = sand.u32 %s87, 1
        %s499 = sand.u32 %s87, 1
        %s500 = smul.addr %s499, 16
        %s501 = scalar_lea.vmem [#allocation3], %s500
        %p502 = scmp.lt.s32.totalorder %s20, 1
        %s503 = scalar_select %p502, %s20, 1
        %s504 = smul.addr %s503, 2
        %s505 = smul.addr %s504, 8
        %s506 = scalar_lea.vmem %s3, %s505
        %p507 = scmp.lt.s32.totalorder %s20, 1
        %s508 = scalar_select %p507, %s20, 1
        %s509 = smul.addr %s508, 2
        %s510 = smul.addr %s509, 8
        %s511 = scalar_lea.vmem %s4, %s510
        // Predicated region
        $region79: #{initial_block_forward.1} parent=61 // pred_check
          %p512 = pneg %p97
        $region80: #{initial_block_forward.1} parent=61 // pred_check_branch
          %514 = sbr.rel (%p512) target = $region82
        $region81: #{initial_block_forward.1} parent=61 // pred_region
          %s515 = sadd.s32 %s20, %s21
          %s516 = smul.addr %s515, 8
          %s517 = scalar_lea.vmem %s2, %s516
          // Predicated region
          $region83: #{initial_block_forward.1} parent=81 // pred_check
            _
          $region84: #{initial_block_forward.1} parent=81 // pred_check_branch
            %519 = sbr.rel (0) target = $region86
          $region85: #{initial_block_forward.1} parent=81 // pred_region
            // Predicated region
            $region87: #{initial_block_forward.1} parent=85 // pred_check
              _
            $region88: #{initial_block_forward.1} parent=85 // pred_check_branch
              %521 = sbr.rel (0) target = $region90
            $region89: #{initial_block_forward.1} parent=85 // pred_region
              // Predicated region
              $region102: #{initial_block_forward.1} parent=89 // pred_check
                _
              $region103: #{initial_block_forward.1} parent=89 // pred_check_branch
                %539 = sbr.rel (0) target = $region105
              $region104: #{initial_block_forward.1} parent=89 // pred_region
                loop: start=0, step=1, limit=1
                $region106: #{initial_block_forward.1} parent=104 // loop_pre_header
                  _
                $region107: #{initial_block_forward.1} parent=104 // loop_header
                  %s541 = sphi 0, %s545
                  %p542 = scmp.ge.s32.totalorder %s541, 1
                  %s546 = sphi %s501, %s501
                  %s547 = sphi %s517, %s517
                $region108: #{initial_block_forward.1} parent=104 // loop_header_branch
                  %544 = sbr.rel (%p542) target = $region112
                $region109: #{initial_block_forward.1} parent=104 // loop_body
                  %v548 = vld [vmem:[%s546] sm:$0xff]
                  %549 = vst [vmem:[%s547] sm:$0xff] %v548
                  %v550 = vld [vmem:[%s546 + $0x8] sm:$0xff]
                  %551 = vst [vmem:[%s547 + $0x10] sm:$0xff] %v550
                $region110: #{initial_block_forward.1} parent=104 // loop_footer
                  %s545 = sadd.s32 1, %s541
                $region111: #{initial_block_forward.1} parent=104 // loop_footer_branch
                  %540 = sbr.rel target = $region107
                $region112: #{initial_block_forward.1} parent=104 // loop_exit
                  _
              $region105: #{initial_block_forward.1} parent=89 // pred_fallthru
                _
              // Predicated region
              $region113: #{initial_block_forward.1} parent=89 // pred_check
                _
              $region114: #{initial_block_forward.1} parent=89 // pred_check_branch
                %553 = sbr.rel target = $region116
              $region115: #{initial_block_forward.1} parent=89 // pred_region
                _
              $region116: #{initial_block_forward.1} parent=89 // pred_fallthru
                _
            $region90: #{initial_block_forward.1} parent=85 // pred_fallthru
              _
            // Predicated region
            $region91: #{initial_block_forward.1} parent=85 // pred_check
              _
            $region92: #{initial_block_forward.1} parent=85 // pred_check_branch
              %523 = sbr.rel target = $region94
            $region93: #{initial_block_forward.1} parent=85 // pred_region
              %s525 = ssub.s32 256, 1
              loop: start=0, step=1, limit=1
              $region95: #{initial_block_forward.1} parent=93 // loop_pre_header
                _
              $region96: #{initial_block_forward.1} parent=93 // loop_header
                %s527 = sphi 0, %s531
                %p528 = scmp.ge.s32.totalorder %s527, 1
                %s532 = sphi %s501, %s501
                %s533 = sphi %s517, %s517
              $region97: #{initial_block_forward.1} parent=93 // loop_header_branch
                %530 = sbr.rel (%p528) target = $region101
              $region98: #{initial_block_forward.1} parent=93 // loop_body
                %v534 = vld [vmem:[%s532] sm:%s525]
                %535 = vst [vmem:[%s533] sm:%s525] %v534
                %v536 = vld [vmem:[%s532 + $0x8] sm:%s525]
                %537 = vst [vmem:[%s533 + $0x10] sm:%s525] %v536
              $region99: #{initial_block_forward.1} parent=93 // loop_footer
                %s531 = sadd.s32 1, %s527
              $region100: #{initial_block_forward.1} parent=93 // loop_footer_branch
                %526 = sbr.rel target = $region96
              $region101: #{initial_block_forward.1} parent=93 // loop_exit
                _
            $region94: #{initial_block_forward.1} parent=85 // pred_fallthru
              _
          $region86: #{initial_block_forward.1} parent=81 // pred_fallthru
            _
          %554 = vnop
        $region82: #{initial_block_forward.1} parent=61 // pred_fallthru
          _
        // Predicated region
        $region117: #{initial_block_forward.1} parent=61 // pred_check
          %p555 = pneg %p123
        $region118: #{initial_block_forward.1} parent=61 // pred_check_branch
          %557 = sbr.rel (%p555) target = $region120
        $region119: #{initial_block_forward.1} parent=61 // pred_region
          _
        $region120: #{initial_block_forward.1} parent=61 // pred_fallthru
          _
        // Predicated region
        $region121: #{initial_block_forward.1} parent=61 // pred_check
          %p558 = pneg %p149
        $region122: #{initial_block_forward.1} parent=61 // pred_check_branch
          %560 = sbr.rel (%p558) target = $region124
        $region123: #{initial_block_forward.1} parent=61 // pred_region
          _
        $region124: #{initial_block_forward.1} parent=61 // pred_fallthru
          _
      $region62: #{initial_block_forward.1} parent=5 // pred_fallthru
        _
      %p561 = scmp.le.s32.totalorder 2, %s11
      // Predicated region
      $region125: #{initial_block_forward.1} parent=5 // pred_check
        %p562 = pneg %p561
      $region126: #{initial_block_forward.1} parent=5 // pred_check_branch
        %564 = sbr.rel (%p562) target = $region128
      $region127: #{initial_block_forward.1} parent=5 // pred_region
        %s565 = ssub.s32 %s11, 2
        // Predicated region
        $region129: #{initial_block_forward.1} parent=127 // pred_check
          %p566 = pneg %p103
        $region130: #{initial_block_forward.1} parent=127 // pred_check_branch
          %568 = sbr.rel (%p566) target = $region132
        $region131: #{initial_block_forward.1} parent=127 // pred_region
          %s569 = sand.u32 %s88, 1
          %s570 = sand.u32 %s88, 1
          %s571 = smul.addr %s570, 16
          %s572 = scalar_lea.vmem [#allocation3], %s571
        $region132: #{initial_block_forward.1} parent=127 // pred_fallthru
          _
        // Predicated region
        $region133: #{initial_block_forward.1} parent=127 // pred_check
          %p573 = pneg %p129
        $region134: #{initial_block_forward.1} parent=127 // pred_check_branch
          %575 = sbr.rel (%p573) target = $region136
        $region135: #{initial_block_forward.1} parent=127 // pred_region
          %p576 = scmp.lt.s32.totalorder %s22, 1
          %s577 = scalar_select %p576, %s22, 1
          %s578 = smul.addr %s577, 2
          %s579 = smul.addr %s578, 8
          %s580 = scalar_lea.vmem %s3, %s579
        $region136: #{initial_block_forward.1} parent=127 // pred_fallthru
          _
        // Predicated region
        $region137: #{initial_block_forward.1} parent=127 // pred_check
          %p581 = pneg %p155
        $region138: #{initial_block_forward.1} parent=127 // pred_check_branch
          %583 = sbr.rel (%p581) target = $region140
        $region139: #{initial_block_forward.1} parent=127 // pred_region
          %p584 = scmp.lt.s32.totalorder %s22, 1
          %s585 = scalar_select %p584, %s22, 1
          %s586 = smul.addr %s585, 2
          %s587 = smul.addr %s586, 8
          %s588 = scalar_lea.vmem %s4, %s587
        $region140: #{initial_block_forward.1} parent=127 // pred_fallthru
          _
      $region128: #{initial_block_forward.1} parent=5 // pred_fallthru
        _
    $region6: #{initial_block_forward.1} parent=1 // loop_footer
      %s15 = sadd.s32 1, %s11
    $region7: #{initial_block_forward.1} parent=1 // loop_footer_branch
      %10 = sbr.rel target = $region3
    $region8: #{initial_block_forward.1} parent=1 // loop_exit
      _

</llo_original>
